<compile_context>
chip_gen: v5e
topology: v5e:2x2
jax: 0.10.0
libtpu: 0.0.40
codegen_flags: <defaults>
</compile_context>

<pallas_src>
import functools

import jax
import jax.numpy as jnp
from jax.experimental import pallas as pl
from jax.experimental.pallas import tpu as pltpu  # noqa: F401  (TPU backend import)


def head_kernel(x_ref, w_ref, o_ref, *, scale):
    """All batch elements at once: QKV projection + causal softmax attention.

    x_ref: (B, T, E)   w_ref: (3, E, H) stacked [Wq, Wk, Wv]   o_ref: (B, T, H)
    """
    B, T, E = x_ref.shape
    H = w_ref.shape[2]

    # Bigger MXU LHS: fold batch into rows -> (B*T, E).
    x2 = x_ref[...].reshape(B * T, E)

    # Three small matmuls; leading-dim indexing of w_ref is free (no lane slicing).
    q = jnp.dot(x2, w_ref[0], preferred_element_type=jnp.float32) * scale  # fold E**-0.5
    k = jnp.dot(x2, w_ref[1], preferred_element_type=jnp.float32)
    v = jnp.dot(x2, w_ref[2], preferred_element_type=jnp.float32)

    q = q.reshape(B, T, H)
    k = k.reshape(B, T, H)
    v = v.reshape(B, T, H)

    # Batched q @ k^T, contracting on the head dim (no explicit transpose).
    wei = jnp.einsum('btd,bsd->bts', q, k,
                     preferred_element_type=jnp.float32)                  # (B, T, T)

    row = jax.lax.broadcasted_iota(jnp.int32, (T, T), 0)
    col = jax.lax.broadcasted_iota(jnp.int32, (T, T), 1)
    # Large finite negative instead of -inf: exp underflows to exactly 0 and
    # a fully-masked row can never produce NaN.
    wei = jnp.where((col <= row)[None, :, :], wei, -1e30)

    # Numerically-stable softmax; divide goes to the EUP via approx reciprocal.
    wei = wei - jnp.max(wei, axis=-1, keepdims=True)
    p = jnp.exp(wei)
    denom = jnp.sum(p, axis=-1, keepdims=True)                            # (B, T, 1)
    p = p * pl.reciprocal(denom, approx=True)

    out = jnp.einsum('bts,bsd->btd', p, v,
                     preferred_element_type=jnp.float32)                  # (B, T, H)
    o_ref[...] = out.astype(o_ref.dtype)


def head_forward(x, wq, wk, wv):
    """Pallas forward for `Head`. x: (B, T, E); wq/wk/wv: (E, H). Returns (B, T, H)."""
    B, T, E = x.shape
    H = wq.shape[1]
    scale = E ** (-0.5)  # NOTE: module scales by num_embds**-0.5 (not head_size) — intentional.

    # Stack projection weights along a LEADING dim (3, E, H): leading-dim
    # indexing inside the kernel is free, unlike non-128-aligned lane slices.
    w_qkv = jnp.stack([wq, wk, wv], axis=0)                               # (3, E, H)

    return pl.pallas_call(
        functools.partial(head_kernel, scale=scale),
        out_shape=jax.ShapeDtypeStruct((B, T, H), x.dtype),
        # No grid: the whole problem is one step (per-step overhead dominates
        # at these shapes), everything resident in VMEM.
        in_specs=[
            pl.BlockSpec((B, T, E), lambda: (0, 0, 0)),
            pl.BlockSpec((3, E, H), lambda: (0, 0, 0)),
        ],
        out_specs=pl.BlockSpec((B, T, H), lambda: (0, 0, 0)),
    )(x, w_qkv)


def reference(x, wq, wk, wv):
    """Pure-JAX reference mirroring the PyTorch `Head.forward`."""
    B, T, E = x.shape
    q = x @ wq
    k = x @ wk
    v = x @ wv
    wei = (q @ jnp.swapaxes(k, -1, -2)) * (E ** -0.5)
    mask = jnp.tril(jnp.ones((T, T), dtype=bool))
    wei = jnp.where(mask, wei, -jnp.inf)
    wei = jax.nn.softmax(wei, axis=-1)
    return wei @ v


if __name__ == "__main__":
    # Shapes consistent with the module: num_embds=32, head_size=8,
    # context_size=8; batch=2, seq T=8.
    B, T, E, H = 2, 8, 32, 8

    key = jax.random.PRNGKey(0)
    k_x, k_q, k_k, k_v = jax.random.split(key, 4)

    x = jax.random.normal(k_x, (B, T, E), dtype=jnp.float32)
    # Weights stored as (E, H), i.e. the transpose of nn.Linear.weight (H, E),
    # so that q = x @ wq matches nn.Linear(x) with bias=False.
    wq = jax.random.normal(k_q, (E, H), dtype=jnp.float32) * 0.1
    wk = jax.random.normal(k_k, (E, H), dtype=jnp.float32) * 0.1
    wv = jax.random.normal(k_v, (E, H), dtype=jnp.float32) * 0.1

    out = head_forward(x, wq, wk, wv)
    out = jax.block_until_ready(out)

    ref = reference(x, wq, wk, wv)
    assert out.shape == (B, T, H)
    # Tolerance allows for the EUP approximate-reciprocal in the softmax divide.
    assert jnp.allclose(out, ref, atol=2e-3, rtol=2e-3), "mismatch vs reference"

    print("KERNEL_OK")
</pallas_src>

<mosaic_0001>
module attributes {stable_mosaic.version = 11 : i64} {
  func.func @head_kernel(%arg0: memref<2x8x32xf32, #tpu.memory_space<vmem>>, %arg1: memref<3x32x8xf32, #tpu.memory_space<vmem>>, %arg2: memref<2x8x8xf32, #tpu.memory_space<vmem>>) attributes {dimension_semantics = [], scalar_prefetch = 0 : i64, scratch_operands = 0 : i64, tpu.core_type = #tpu.core_type<tc>} {
    %c0 = arith.constant 0 : index
    %c0_0 = arith.constant 0 : index
    %c0_1 = arith.constant 0 : index
    %0 = vector.load %arg0[%c0, %c0_0, %c0_1] : memref<2x8x32xf32, #tpu.memory_space<vmem>>, vector<2x8x32xf32>
    %1 = vector.shape_cast %0 : vector<2x8x32xf32> to vector<16x32xf32>
    %c0_2 = arith.constant 0 : index
    %c0_3 = arith.constant 0 : index
    %c0_4 = arith.constant 0 : index
    %2 = vector.load %arg1[%c0_2, %c0_3, %c0_4] : memref<3x32x8xf32, #tpu.memory_space<vmem>>, vector<1x32x8xf32>
    %3 = vector.shape_cast %2 : vector<1x32x8xf32> to vector<32x8xf32>
    %cst = arith.constant dense<0.000000e+00> : vector<16x8xf32>
    %4 = tpu.matmul %1, %3, %cst {dimension_numbers = #tpu.dot_dimension_numbers<[1], [0], [0], [1], [0, 0, 1, 1], [], []>} : vector<16x32xf32>, vector<32x8xf32>, vector<16x8xf32> -> vector<16x8xf32>
    %cst_5 = arith.constant 0.176776692 : f32
    %5 = vector.broadcast %cst_5 : f32 to vector<16x8xf32>
    %6 = arith.mulf %4, %5 : vector<16x8xf32>
    %c1 = arith.constant 1 : index
    %c0_6 = arith.constant 0 : index
    %c0_7 = arith.constant 0 : index
    %7 = vector.load %arg1[%c1, %c0_6, %c0_7] : memref<3x32x8xf32, #tpu.memory_space<vmem>>, vector<1x32x8xf32>
    %8 = vector.shape_cast %7 : vector<1x32x8xf32> to vector<32x8xf32>
    %cst_8 = arith.constant dense<0.000000e+00> : vector<16x8xf32>
    %9 = tpu.matmul %1, %8, %cst_8 {dimension_numbers = #tpu.dot_dimension_numbers<[1], [0], [0], [1], [0, 0, 1, 1], [], []>} : vector<16x32xf32>, vector<32x8xf32>, vector<16x8xf32> -> vector<16x8xf32>
    %c2 = arith.constant 2 : index
    %c0_9 = arith.constant 0 : index
    %c0_10 = arith.constant 0 : index
    %10 = vector.load %arg1[%c2, %c0_9, %c0_10] : memref<3x32x8xf32, #tpu.memory_space<vmem>>, vector<1x32x8xf32>
    %11 = vector.shape_cast %10 : vector<1x32x8xf32> to vector<32x8xf32>
    %cst_11 = arith.constant dense<0.000000e+00> : vector<16x8xf32>
    %12 = tpu.matmul %1, %11, %cst_11 {dimension_numbers = #tpu.dot_dimension_numbers<[1], [0], [0], [1], [0, 0, 1, 1], [], []>} : vector<16x32xf32>, vector<32x8xf32>, vector<16x8xf32> -> vector<16x8xf32>
    %13 = vector.shape_cast %6 : vector<16x8xf32> to vector<2x8x8xf32>
    %14 = vector.shape_cast %9 : vector<16x8xf32> to vector<2x8x8xf32>
    %15 = vector.shape_cast %12 : vector<16x8xf32> to vector<2x8x8xf32>
    "tpu.trace_start"() <{level = 10 : i32, message = "btd,bsd->bts"}> : () -> ()
    %cst_12 = arith.constant dense<0.000000e+00> : vector<2x8x8xf32>
    %16 = tpu.matmul %13, %14, %cst_12 {dimension_numbers = #tpu.dot_dimension_numbers<[2], [2], [1], [1], [0, 0, 0, 1, 1, 1], [0], [0]>} : vector<2x8x8xf32>, vector<2x8x8xf32>, vector<2x8x8xf32> -> vector<2x8x8xf32>
    "tpu.trace_stop"() : () -> ()
    %17 = tpu.iota {dimensions = array<i32: 0>} : vector<8x8xi32>
    %18 = tpu.iota {dimensions = array<i32: 1>} : vector<8x8xi32>
    %19 = arith.cmpi sle, %18, %17 : vector<8x8xi32>
    %20 = vector.shape_cast %19 : vector<8x8xi1> to vector<1x8x8xi1>
    %cst_13 = arith.constant -1.000000e+30 : f32
    %21 = vector.shape_cast %20 : vector<1x8x8xi1> to vector<1x8x8xi1>
    %22 = vector.broadcast %21 : vector<1x8x8xi1> to vector<2x8x8xi1>
    %23 = vector.broadcast %cst_13 : f32 to vector<2x8x8xf32>
    %24 = arith.select %22, %16, %23 : vector<2x8x8xi1>, vector<2x8x8xf32>
    %cst_14 = arith.constant dense<0xFF800000> : vector<2x8xf32>
    %25 = vector.multi_reduction <maximumf>, %24, %cst_14 [2] : vector<2x8x8xf32> to vector<2x8xf32>
    %26 = vector.shape_cast %25 : vector<2x8xf32> to vector<2x8x1xf32>
    %27 = vector.broadcast %26 : vector<2x8x1xf32> to vector<2x8x8xf32>
    %28 = arith.subf %24, %27 : vector<2x8x8xf32>
    %29 = math.exp %28 : vector<2x8x8xf32>
    %cst_15 = arith.constant dense<0.000000e+00> : vector<2x8xf32>
    %30 = vector.multi_reduction <add>, %29, %cst_15 [2] : vector<2x8x8xf32> to vector<2x8xf32>
    %31 = vector.shape_cast %30 : vector<2x8xf32> to vector<2x8x1xf32>
    %32 = tpu.reciprocal %31 {approx = true} : vector<2x8x1xf32> -> vector<2x8x1xf32>
    %33 = vector.broadcast %32 : vector<2x8x1xf32> to vector<2x8x8xf32>
    %34 = arith.mulf %29, %33 : vector<2x8x8xf32>
    "tpu.trace_start"() <{level = 10 : i32, message = "bts,bsd->btd"}> : () -> ()
    %cst_16 = arith.constant dense<0.000000e+00> : vector<2x8x8xf32>
    %35 = tpu.matmul %34, %15, %cst_16 {dimension_numbers = #tpu.dot_dimension_numbers<[2], [1], [1], [2], [0, 0, 0, 1, 1, 2], [0], [0]>} : vector<2x8x8xf32>, vector<2x8x8xf32>, vector<2x8x8xf32> -> vector<2x8x8xf32>
    "tpu.trace_stop"() : () -> ()
    %c0_17 = arith.constant 0 : index
    %c0_18 = arith.constant 0 : index
    %c0_19 = arith.constant 0 : index
    %36 = vector.load %arg2[%c0_17, %c0_18, %c0_19] : memref<2x8x8xf32, #tpu.memory_space<vmem>>, vector<2x8x8xf32>
    tpu.vector_store %arg2[%c0_17, %c0_18, %c0_19], %35 {strides = array<i32>} : memref<2x8x8xf32, #tpu.memory_space<vmem>>, vector<2x8x8xf32>,
    return
  }
}

</mosaic_0001>

<llo_original>
// kernel: tpu_custom_call.1
$region0: #{tpu_custom_call.1}
  #allocation0 [shape = 'u32[]', space=smem, size = 0x4, offset = 0x4, fixed_abs, tag = 'smem constant byte address 0x4 - core index']
  #allocation1 [shape = 'u32[72,128]{1,0:T(1,128)}', space=vmem, size = 0x9000, scoped, tag = 'internal scratch']
  %s0 = inlined_call_operand.vmem [shape: f32[2,8,32], index: 0, kind: input, shape index: {}]
  %s1 = inlined_call_operand.vmem [shape: f32[3,32,8], index: 1, kind: input, shape index: {}]
  %s2 = inlined_call_operand.hbm [shape: f32[2,8,8], index: 2, kind: output, shape index: {}]
  %s3 = sld [smem:[#allocation0]]
  $region18: #{tpu_custom_call.1} parent=0
    _
  %s5 = ssub.s32 1, %s3
  %s6 = scalar_select 0, %s5, %s3
  $region1: #{tpu_custom_call.1} parent=0
    #allocation2 [shape = 'u8[8192]{0}', space=vmem, size = 0x2000, scoped, tag = 'output window, operand 0, single buffered']
    #allocation3 [shape = 's32[1]{0}', space=sflag, size = 0x4, scoped, tag = 'scoped memory for tpu_custom_call.1']
    %7 = vsyncpa [#allocation3], 0
    // Predicated region
    $region2: #{tpu_custom_call.1} parent=1 // pred_check
      _
    $region3: #{tpu_custom_call.1} parent=1 // pred_check_branch
      %9 = sbr.rel (0) target = $region5
    $region4: #{tpu_custom_call.1} parent=1 // pred_region
      _
    $region5: #{tpu_custom_call.1} parent=1 // pred_fallthru
      _
    // Predicated region
    $region6: #{tpu_custom_call.1} parent=1 // pred_check
      _
    $region7: #{tpu_custom_call.1} parent=1 // pred_check_branch
      %11 = sbr.rel (0) target = $region9
    $region8: #{tpu_custom_call.1} parent=1 // pred_region
      _
    $region9: #{tpu_custom_call.1} parent=1 // pred_fallthru
      _
    %v12 = vld [vmem:[%s0] sm:$0xff]
    %v13 = vld [vmem:[%s0 + $0x8] sm:$0xff]
    %v14 = vld [vmem:[%s1] sm:$0xff]
    %v15 = vld [vmem:[%s1 + $0x8] sm:$0xff]
    %v16 = vld [vmem:[%s1 + $0x10] sm:$0xff]
    %v17 = vld [vmem:[%s1 + $0x18] sm:$0xff]
    %vm18 = vcmask 261120
    %v20 = vsel %vm18, %v12, 0
    %v23 = vsel %vm18, %v13, 0
    %25 = vmatpush.msra.mxu0 0.0
    %26 = vmatpush.msra.mxu0 0.0
    %27 = vmatpush.msra.mxu0 0.0
    %28 = vmatpush.msra.mxu0 0.0
    %29 = vmatpush.msra.mxu0 0.0
    %30 = vmatpush.msra.mxu0 0.0
    %31 = vmatpush.msra.mxu0 0.0
    %32 = vmatpush.msra.mxu0 0.0
    %33 = vmatpush.msra.mxu0 0.0
    %34 = vmatpush.msra.mxu0 0.0
    %35 = vmatpush.msra.mxu0 0.0
    %36 = vmatpush.msra.mxu0 0.0
    %37 = vmatpush.msra.mxu0 %v17
    %38 = vmatpush.msra.mxu0 %v16
    %39 = vmatpush.msra.mxu0 %v15
    %40 = vmatpush.msra.mxu0 %v14
    %41 = vmatmul.f32.gmra.mxu0 %v20
    %v42 = vpop.f32.mrf.mxu0
    %v43 = vadd.f32 0.0, %v42
    %44 = vmatmul.f32.gmra.mxu0 %v23
    %v45 = vpop.f32.mrf.mxu0
    %v46 = vadd.f32 0.0, %v45
    %47 = vdwg.mxu0
    %v48 = vmul.f32 %v43, 0.17677669
    %v49 = vmul.f32 %v46, 0.17677669
    %s50 = scalar_lea.vmem %s1, 32
    %v51 = vld [vmem:[%s50] sm:$0xff]
    %v52 = vld [vmem:[%s50 + $0x8] sm:$0xff]
    %v53 = vld [vmem:[%s50 + $0x10] sm:$0xff]
    %v54 = vld [vmem:[%s50 + $0x18] sm:$0xff]
    %55 = vmatpush.msra.mxu0 0.0
    %56 = vmatpush.msra.mxu0 0.0
    %57 = vmatpush.msra.mxu0 0.0
    %58 = vmatpush.msra.mxu0 0.0
    %59 = vmatpush.msra.mxu0 0.0
    %60 = vmatpush.msra.mxu0 0.0
    %61 = vmatpush.msra.mxu0 0.0
    %62 = vmatpush.msra.mxu0 0.0
    %63 = vmatpush.msra.mxu0 0.0
    %64 = vmatpush.msra.mxu0 0.0
    %65 = vmatpush.msra.mxu0 0.0
    %66 = vmatpush.msra.mxu0 0.0
    %67 = vmatpush.msra.mxu0 %v54
    %68 = vmatpush.msra.mxu0 %v53
    %69 = vmatpush.msra.mxu0 %v52
    %70 = vmatpush.msra.mxu0 %v51
    %71 = vmatmul.f32.gmra.mxu0 %v20
    %v72 = vpop.f32.mrf.mxu0
    %v73 = vadd.f32 0.0, %v72
    %74 = vmatmul.f32.gmra.mxu0 %v23
    %v75 = vpop.f32.mrf.mxu0
    %v76 = vadd.f32 0.0, %v75
    %77 = vdwg.mxu0
    %s78 = scalar_lea.vmem %s1, 64
    %v79 = vld [vmem:[%s78] sm:$0xff]
    %v80 = vld [vmem:[%s78 + $0x8] sm:$0xff]
    %v81 = vld [vmem:[%s78 + $0x10] sm:$0xff]
    %v82 = vld [vmem:[%s78 + $0x18] sm:$0xff]
    %83 = vmatpush.msra.mxu0 0.0
    %84 = vmatpush.msra.mxu0 0.0
    %85 = vmatpush.msra.mxu0 0.0
    %86 = vmatpush.msra.mxu0 0.0
    %87 = vmatpush.msra.mxu0 0.0
    %88 = vmatpush.msra.mxu0 0.0
    %89 = vmatpush.msra.mxu0 0.0
    %90 = vmatpush.msra.mxu0 0.0
    %91 = vmatpush.msra.mxu0 0.0
    %92 = vmatpush.msra.mxu0 0.0
    %93 = vmatpush.msra.mxu0 0.0
    %94 = vmatpush.msra.mxu0 0.0
    %95 = vmatpush.msra.mxu0 %v82
    %96 = vmatpush.msra.mxu0 %v81
    %97 = vmatpush.msra.mxu0 %v80
    %98 = vmatpush.msra.mxu0 %v79
    %99 = vmatmul.f32.gmra.mxu0 %v20
    %v100 = vpop.f32.mrf.mxu0
    %v101 = vadd.f32 0.0, %v100
    %102 = vmatmul.f32.gmra.mxu0 %v23
    %v103 = vpop.f32.mrf.mxu0
    %v104 = vadd.f32 0.0, %v103
    %105 = vdwg.mxu0
    %vm106 = vcmask 64512
    %v108 = vsel %vm106, %v48, 0
    %v111 = vsel %vm106, %v73, 0
    %113 = vmatpush.xpose.msra.mxu0 0.0
    %114 = vmatpush.xpose.msra.mxu0 0.0
    %115 = vmatpush.xpose.msra.mxu0 0.0
    %116 = vmatpush.xpose.msra.mxu0 0.0
    %117 = vmatpush.xpose.msra.mxu0 0.0
    %118 = vmatpush.xpose.msra.mxu0 0.0
    %119 = vmatpush.xpose.msra.mxu0 0.0
    %120 = vmatpush.xpose.msra.mxu0 0.0
    %121 = vmatpush.xpose.msra.mxu0 0.0
    %122 = vmatpush.xpose.msra.mxu0 0.0
    %123 = vmatpush.xpose.msra.mxu0 0.0
    %124 = vmatpush.xpose.msra.mxu0 0.0
    %125 = vmatpush.xpose.msra.mxu0 0.0
    %126 = vmatpush.xpose.msra.mxu0 0.0
    %127 = vmatpush.xpose.msra.mxu0 0.0
    %128 = vmatpush.xpose.msra.mxu0 %v111
    %129 = vmatmul.f32.gmra.mxu0 %v108
    %v130 = vpop.f32.mrf.mxu0
    %v131 = vadd.f32 0.0, %v130
    %132 = vdwg.mxu0
    %v134 = vsel %vm106, %v49, 0
    %v137 = vsel %vm106, %v76, 0
    %139 = vmatpush.xpose.msra.mxu0 0.0
    %140 = vmatpush.xpose.msra.mxu0 0.0
    %141 = vmatpush.xpose.msra.mxu0 0.0
    %142 = vmatpush.xpose.msra.mxu0 0.0
    %143 = vmatpush.xpose.msra.mxu0 0.0
    %144 = vmatpush.xpose.msra.mxu0 0.0
    %145 = vmatpush.xpose.msra.mxu0 0.0
    %146 = vmatpush.xpose.msra.mxu0 0.0
    %147 = vmatpush.xpose.msra.mxu0 0.0
    %148 = vmatpush.xpose.msra.mxu0 0.0
    %149 = vmatpush.xpose.msra.mxu0 0.0
    %150 = vmatpush.xpose.msra.mxu0 0.0
    %151 = vmatpush.xpose.msra.mxu0 0.0
    %152 = vmatpush.xpose.msra.mxu0 0.0
    %153 = vmatpush.xpose.msra.mxu0 0.0
    %154 = vmatpush.xpose.msra.mxu0 %v137
    %155 = vmatmul.f32.gmra.mxu0 %v134
    %v156 = vpop.f32.mrf.mxu0
    %v157 = vadd.f32 0.0, %v156
    %158 = vdwg.mxu0
    %v159 = vlaneseq
    %v160 = vshrl.u32 %v159, 7
    %v161 = vlaneseq
    %v162 = vand.u32 %v161, 127
    %vm163 = vcmp.le.s32.totalorder %v162, %v160
    %v164 = vsel %vm163, 1, 0
    %vm165 = vcmp.eq.s32.totalorder %v164, 1
    %v166 = vsel %vm165, %v131, -1e+30
    %v167 = vsel %vm165, %v157, -1e+30
    %v168 = vsel %vm106, %v166, -inf
    %169 = vmax.xlane.f32.xlu0 %v168
    %v170 = vpop.xlane.xlu0 %169
    %v171 = vsel %vm106, %v167, -inf
    %172 = vmax.xlane.f32.xlu0 %v171
    %v173 = vpop.xlane.xlu0 %172
    %v174 = vsub.f32 %v166, %v170
    %v175 = vsub.f32 %v167, %v173
    %v176 = vmul.f32 %v174, 1.442695
    %v177 = vpow.pop %v176
    %v178 = vmul.f32 %v175, 1.442695
    %v179 = vpow.pop %v178
    %v180 = vsel %vm106, %v177, 0.0
    %181 = vadd.xlane.f32.xlu0 %v180
    %v182 = vpop.xlane.xlu0 %181
    %v183 = vsel %vm106, %v179, 0.0
    %184 = vadd.xlane.f32.xlu0 %v183
    %v185 = vpop.xlane.xlu0 %184
    %v186 = vrcp.pop %v182
    %v187 = vrcp.pop %v185
    %v188 = vmul.f32 %v177, %v186
    %v189 = vmul.f32 %v179, %v187
    %v191 = vsel %vm106, %v188, 0
    %193 = vmatpush.msra.mxu0 0.0
    %194 = vmatpush.msra.mxu0 0.0
    %195 = vmatpush.msra.mxu0 0.0
    %196 = vmatpush.msra.mxu0 0.0
    %197 = vmatpush.msra.mxu0 0.0
    %198 = vmatpush.msra.mxu0 0.0
    %199 = vmatpush.msra.mxu0 0.0
    %200 = vmatpush.msra.mxu0 0.0
    %201 = vmatpush.msra.mxu0 0.0
    %202 = vmatpush.msra.mxu0 0.0
    %203 = vmatpush.msra.mxu0 0.0
    %204 = vmatpush.msra.mxu0 0.0
    %205 = vmatpush.msra.mxu0 0.0
    %206 = vmatpush.msra.mxu0 0.0
    %207 = vmatpush.msra.mxu0 0.0
    %208 = vmatpush.msra.mxu0 %v101
    %209 = vmatmul.f32.gmra.mxu0 %v191
    %v210 = vpop.f32.mrf.mxu0
    %v211 = vadd.f32 0.0, %v210
    %212 = vdwg.mxu0
    %v214 = vsel %vm106, %v189, 0
    %216 = vmatpush.msra.mxu0 0.0
    %217 = vmatpush.msra.mxu0 0.0
    %218 = vmatpush.msra.mxu0 0.0
    %219 = vmatpush.msra.mxu0 0.0
    %220 = vmatpush.msra.mxu0 0.0
    %221 = vmatpush.msra.mxu0 0.0
    %222 = vmatpush.msra.mxu0 0.0
    %223 = vmatpush.msra.mxu0 0.0
    %224 = vmatpush.msra.mxu0 0.0
    %225 = vmatpush.msra.mxu0 0.0
    %226 = vmatpush.msra.mxu0 0.0
    %227 = vmatpush.msra.mxu0 0.0
    %228 = vmatpush.msra.mxu0 0.0
    %229 = vmatpush.msra.mxu0 0.0
    %230 = vmatpush.msra.mxu0 0.0
    %231 = vmatpush.msra.mxu0 %v104
    %232 = vmatmul.f32.gmra.mxu0 %v214
    %v233 = vpop.f32.mrf.mxu0
    %v234 = vadd.f32 0.0, %v233
    %235 = vdwg.mxu0
    %236 = vst.msk [vmem:[#allocation2] sm:$0xff] %vm106, %v211
    %237 = vst.msk [vmem:[#allocation2 + $0x8] sm:$0xff] %vm106, %v234
    // Predicated region
    $region10: #{tpu_custom_call.1} parent=1 // pred_check
      _
    $region11: #{tpu_custom_call.1} parent=1 // pred_check_branch
      %239 = sbr.rel (0) target = $region13
    $region12: #{tpu_custom_call.1} parent=1 // pred_region
      %241 = vsyncadd [#allocation3], 0
      %s242 = sshll.u32 [#allocation2], 4
      %s243 = int_to_ptr.vmem [resolvable:$true] %s242
      %s244 = sshll.u32 %s2, 4
      %s245 = int_to_ptr.hbm [resolvable:$true] %s244
      %250 = dma.vmem_to_hbm [thread:$0]  %s243, 256, %s245, [#allocation3], 128, 128, 8
    $region13: #{tpu_custom_call.1} parent=1 // pred_fallthru
      _
    // Predicated region
    $region14: #{tpu_custom_call.1} parent=1 // pred_check
      _
    $region15: #{tpu_custom_call.1} parent=1 // pred_check_branch
      %252 = sbr.rel (0) target = $region17
    $region16: #{tpu_custom_call.1} parent=1 // pred_region
      %254 = dma.done [#allocation3], 256
    $region17: #{tpu_custom_call.1} parent=1 // pred_fallthru
      _
    %255 = vsyncpa [#allocation3], 1

</llo_original>
